<compile_context>
chip_gen: v6e
topology: v6e:2x2x1
jax: 0.10.0
libtpu: 0.0.40
codegen_flags: <defaults>
</compile_context>

<pallas_src>
import functools
import math

import jax
import jax.numpy as jnp
from jax.experimental import pallas as pl
from jax.experimental.pallas import tpu as pltpu


def _make_pe(max_len, d_model, dtype=jnp.float32):
    """Deterministic positional-encoding table, identical to the PyTorch __init__."""
    position = jnp.arange(max_len, dtype=jnp.float32)[:, None]                    # [max_len, 1]
    div_term = jnp.exp(
        jnp.arange(0, d_model, 2, dtype=jnp.float32) * (-math.log(10000.0) / d_model)
    )                                                                              # [d_model/2]
    angles = position * div_term                                                   # [max_len, d_model/2]
    pe = jnp.zeros((max_len, d_model), dtype=jnp.float32)
    pe = pe.at[:, 0::2].set(jnp.sin(angles))
    pe = pe.at[:, 1::2].set(jnp.cos(angles))
    return pe[:, None, :].astype(dtype)                                            # [max_len, 1, d_model]


def _chip_budget():
    """Per-generation (tile target bytes, scoped-VMEM limit, #TensorCores).

    Trace-time hardware query with a conservative fallback that is valid on every
    TPU generation (v5e scoped default is only 16 MiB, v7x physical VMEM is 64 MiB).
    """
    vmem_cap = None
    n_cores = 1
    try:
        info = pltpu.get_tpu_info()
        try:
            vmem_cap = int(getattr(info, "vmem_capacity_bytes"))
        except Exception:
            vmem_cap = None
        for attr in ("num_tensorcores", "tensorcore_count", "num_cores", "core_count"):
            v = getattr(info, attr, None)
            try:
                v = int(v)
            except Exception:
                continue
            if v > 0:
                n_cores = v
                break
    except Exception:
        pass

    if not vmem_cap or vmem_cap <= 0:
        # Unknown chip: 4 MiB x-tiles, 32 MiB scoped VMEM — safe everywhere.
        return 4 * 1024 * 1024, 32 * 1024 * 1024, n_cores

    # Request 3/4 of physical VMEM, capped at 64 MiB (v7x: 48 MiB, v5e/v6e: 64 MiB).
    vmem_limit = min((vmem_cap * 3) // 4, 64 * 1024 * 1024)
    # Live buffers per step ~ double-buffered x-in + out (4 tiles) + pe blocks +
    # the in-kernel pe_row intermediate (~1-2 tiles) -> budget 1/8 of the limit.
    target = max(1 * 1024 * 1024, min(8 * 1024 * 1024, vmem_limit // 8))
    return target, vmem_limit, n_cores


def _pos_enc_kernel(x_ref, pe_ref, o_ref, *, fold, batch, d_model):
    # x_ref / o_ref: [tile, fold * batch * d_model]   (lane-dense 2D blocks)
    # pe_ref:        [tile, fold * d_model]
    #
    # Folded row layout of x is [fold, batch, d_model]; pe does not depend on batch,
    # so the broadcast is: for each fold-slot p, repeat the d_model-wide pe chunk
    # `batch` times along lanes.  One row-wide add + store (unmasked when the row
    # width is a multiple of 128).
    if batch == 1:
        pe_row = pe_ref[...]                              # layout already matches x
    elif fold == 1:
        pe_row = jnp.concatenate([pe_ref[...]] * batch, axis=-1)
    else:
        parts = []
        for p in range(fold):
            chunk = pe_ref[:, p * d_model:(p + 1) * d_model]
            parts.extend([chunk] * batch)
        pe_row = jnp.concatenate(parts, axis=-1)
    o_ref[...] = x_ref[...] + pe_row


def positional_encoding(x, pe, *, tile_seq=None, donate_x=False):
    """x: [seq_len, batch, d_model]; pe: [max_len, 1, d_model] (max_len >= seq_len)."""
    seq_len, batch, d_model = x.shape
    row = batch * d_model
    itemsize = jnp.dtype(x.dtype).itemsize

    # ---- lane folding: make the minor (lane) dim a multiple of 128 when possible ----
    fold = 1
    if row % 128 != 0:
        k = 128 // math.gcd(row, 128)
        if k > 1 and seq_len % k == 0 and k <= 16 and k * batch <= 64:
            fold = k
    seq_f = seq_len // fold
    row_f = fold * row

    # Free contiguous reshapes (no HBM pass): lane-dense 2D layouts.
    x2d = x.reshape(seq_f, row_f)
    pe2d = pe[:seq_len, 0, :].astype(x.dtype).reshape(seq_f, fold * d_model)

    sub = max(8, 32 // itemsize)  # sublane packing multiple: 8 (f32), 16 (bf16), 32 (i8)
    target_bytes, vmem_limit, n_cores = _chip_budget()

    # ---- sequence tiling ----
    if tile_seq is None:
        t = max(sub, (target_bytes // max(1, row_f * itemsize)) // sub * sub)
        if t >= seq_f:
            if n_cores > 1 and seq_f > sub:
                # Whole sequence fits one block: split into 2 tiles so the "parallel"
                # grid axis can shard across the 2 TensorCores (v7x).
                half = -(-seq_f // 2)
                half = -(-half // sub) * sub
                t = half if 0 < half < seq_f else seq_f
            else:
                t = seq_f  # single-TC chip: one block, no useless grid-step overhead
        t = min(t, seq_f)
    else:
        t = max(1, tile_seq // fold)
        t = min(t, seq_f)
        if t < seq_f and t % sub:
            t = max(sub, (t // sub) * sub)

    # Ragged tails handled by Pallas block clipping (pure elementwise op, so padded
    # rows only feed discarded output rows).
    grid = (pl.cdiv(seq_f, t),)

    kernel = functools.partial(_pos_enc_kernel, fold=fold, batch=batch, d_model=d_model)
    out2d = pl.pallas_call(
        kernel,
        out_shape=jax.ShapeDtypeStruct((seq_f, row_f), x.dtype),
        grid=grid,
        in_specs=[
            pl.BlockSpec((t, row_f), lambda i: (i, 0)),            # x: full-width blocks
            pl.BlockSpec((t, fold * d_model), lambda i: (i, 0)),   # pe: compact per seq-tile
        ],
        out_specs=pl.BlockSpec((t, row_f), lambda i: (i, 0)),
        compiler_params=pltpu.CompilerParams(
            dimension_semantics=("parallel",),
            vmem_limit_bytes=vmem_limit,
        ),
        input_output_aliases=({0: 0} if donate_x else {}),
    )(x2d, pe2d)

    return out2d.reshape(seq_len, batch, d_model)


if __name__ == "__main__":
    pos_enc = jax.jit(positional_encoding, static_argnames=("tile_seq", "donate_x"))

    # Small shapes consistent with the module ([seq_len, batch, d_model]); three
    # configs to exercise the folded, unfolded-batch-broadcast and batch=1 paths.
    configs = [
        (64, 2, 32, 128),   # row=64  -> lane-folded (fold=2) path
        (16, 2, 128, 64),   # row=256 -> unfolded, in-kernel batch concat of pe
        (32, 1, 64, 64),    # batch=1 -> folded, direct pe block (no broadcast)
    ]

    key = jax.random.PRNGKey(0)
    for idx, (seq_len, batch, d_model, max_len) in enumerate(configs):
        k = jax.random.fold_in(key, idx)
        x = jax.random.normal(k, (seq_len, batch, d_model), dtype=jnp.float32)
        pe = _make_pe(max_len, d_model)

        out = jax.block_until_ready(pos_enc(x, pe))

        # Plain-JAX reference (dropout == identity in eval mode).
        ref = x + pe[:seq_len]
        assert out.shape == (seq_len, batch, d_model)
        assert jnp.allclose(out, ref, atol=1e-6, rtol=1e-6), f"mismatch in config {idx}"

    print("KERNEL_OK")
</pallas_src>

<mosaic_0001>
module attributes {stable_mosaic.version = 11 : i64} {
  func.func @_pos_enc_kernel(%arg0: i32, %arg1: memref<32x128xf32, #tpu.memory_space<vmem>>, %arg2: memref<32x64xf32, #tpu.memory_space<vmem>>, %arg3: memref<32x128xf32, #tpu.memory_space<vmem>>) attributes {dimension_semantics = [#tpu.dimension_semantics<parallel>], iteration_bounds = array<i64: 1>, scalar_prefetch = 0 : i64, scratch_operands = 0 : i64, tpu.core_type = #tpu.core_type<tc>, window_params = [{transform_indices = @transform_0, window_bounds = array<i64: 32, 128>}, {transform_indices = @transform_1, window_bounds = array<i64: 32, 64>}, {transform_indices = @transform_2, window_bounds = array<i64: 32, 128>}]} {
    %c0 = arith.constant 0 : index
    %c0_0 = arith.constant 0 : index
    %0 = vector.load %arg2[%c0, %c0_0] : memref<32x64xf32, #tpu.memory_space<vmem>>, vector<32x32xf32>
    %c0_1 = arith.constant 0 : index
    %c32 = arith.constant 32 : index
    %1 = vector.load %arg2[%c0_1, %c32] : memref<32x64xf32, #tpu.memory_space<vmem>>, vector<32x32xf32>
    %2 = tpu.concatenate %0, %0, %1, %1 in 1 : vector<32x32xf32>, vector<32x32xf32>, vector<32x32xf32>, vector<32x32xf32> -> vector<32x128xf32>
    %c0_2 = arith.constant 0 : index
    %c0_3 = arith.constant 0 : index
    %3 = vector.load %arg1[%c0_2, %c0_3] : memref<32x128xf32, #tpu.memory_space<vmem>>, vector<32x128xf32>
    %4 = arith.addf %3, %2 : vector<32x128xf32>
    %c0_4 = arith.constant 0 : index
    %c0_5 = arith.constant 0 : index
    %5 = vector.load %arg3[%c0_4, %c0_5] : memref<32x128xf32, #tpu.memory_space<vmem>>, vector<32x128xf32>
    tpu.vector_store %arg3[%c0_4, %c0_5], %4 {strides = array<i32>} : memref<32x128xf32, #tpu.memory_space<vmem>>, vector<32x128xf32>,
    return
  }
  func.func @transform_0(%arg0: i32) -> (i32, i32) {
    %c0_i32 = arith.constant 0 : i32
    %c0_i32_0 = arith.constant 0 : i32
    return %arg0, %c0_i32 : i32, i32
  }
  func.func @transform_1(%arg0: i32) -> (i32, i32) {
    %c0_i32 = arith.constant 0 : i32
    %c0_i32_0 = arith.constant 0 : i32
    return %arg0, %c0_i32 : i32, i32
  }
  func.func @transform_2(%arg0: i32) -> (i32, i32) {
    %c0_i32 = arith.constant 0 : i32
    %c0_i32_0 = arith.constant 0 : i32
    return %arg0, %c0_i32 : i32, i32
  }
}

</mosaic_0001>

<llo_original>
// kernel: squeeze.1
$region0: #{squeeze.1}
  %s0 = inlined_call_operand.vmem [shape: f32[64,1,32], index: 0, kind: input, shape index: {}]
  %s1 = inlined_call_operand.vmem [shape: f32[32,64], index: 1, kind: output, shape index: {}]
  %v2 = vld [vmem:[%s0] ss:$2 sm:$0xff]
  %vm3 = vcmask 261120
  %4 = vst.msk [vmem:[%s1] sm:$0xff] %vm3, %v2
  %s5 = scalar_lea.vmem %s0, 16
  %v6 = vld [vmem:[%s5] ss:$2 sm:$0xff]
  %vm7 = vcmask 261120
  %s8 = scalar_lea.vmem %s1, 8
  %9 = vst.msk [vmem:[%s8] sm:$0xff] %vm7, %v6
  %s10 = scalar_lea.vmem %s0, 32
  %v11 = vld [vmem:[%s10] ss:$2 sm:$0xff]
  %vm12 = vcmask 261120
  %s13 = scalar_lea.vmem %s1, 16
  %14 = vst.msk [vmem:[%s13] sm:$0xff] %vm12, %v11
  %s15 = scalar_lea.vmem %s0, 48
  %v16 = vld [vmem:[%s15] ss:$2 sm:$0xff]
  %vm17 = vcmask 261120
  %s18 = scalar_lea.vmem %s1, 24
  %19 = vst.msk [vmem:[%s18] sm:$0xff] %vm17, %v16
  %s20 = scalar_lea.vmem %s0, 1
  %v21 = vld [vmem:[%s20] ss:$2 sm:$0xff]
  %22 = vrot.lane.b32.xlu0 %v21, 32
  %v23 = vpop.permute.xlu0 %22
  %vm24 = vcmask 523520
  %25 = vst.msk [vmem:[%s1] sm:$0xff] %vm24, %v23
  %s26 = scalar_lea.vmem %s0, 17
  %v27 = vld [vmem:[%s26] ss:$2 sm:$0xff]
  %28 = vrot.lane.b32.xlu0 %v27, 32
  %v29 = vpop.permute.xlu0 %28
  %vm30 = vcmask 523520
  %s31 = scalar_lea.vmem %s1, 8
  %32 = vst.msk [vmem:[%s31] sm:$0xff] %vm30, %v29
  %s33 = scalar_lea.vmem %s0, 33
  %v34 = vld [vmem:[%s33] ss:$2 sm:$0xff]
  %35 = vrot.lane.b32.xlu0 %v34, 32
  %v36 = vpop.permute.xlu0 %35
  %vm37 = vcmask 523520
  %s38 = scalar_lea.vmem %s1, 16
  %39 = vst.msk [vmem:[%s38] sm:$0xff] %vm37, %v36
  %s40 = scalar_lea.vmem %s0, 49
  %v41 = vld [vmem:[%s40] ss:$2 sm:$0xff]
  %42 = vrot.lane.b32.xlu0 %v41, 32
  %v43 = vpop.permute.xlu0 %42
  %vm44 = vcmask 523520
  %s45 = scalar_lea.vmem %s1, 24
  %46 = vst.msk [vmem:[%s45] sm:$0xff] %vm44, %v43

// kernel: positional_encoding.1
$region0: #{positional_encoding.1}
  #allocation0 [shape = 'u32[]', space=smem, size = 0x4, offset = 0x4, fixed_abs, tag = 'smem constant byte address 0x4 - core index']
  #allocation1 [shape = 'u32[144,128]{1,0:T(1,128)}', space=vmem, size = 0x12000, scoped, tag = 'internal scratch']
  %s0 = inlined_call_operand.vmem [shape: f32[32,128], index: 0, kind: input, shape index: {}]
  %s1 = inlined_call_operand.vmem [shape: f32[32,64], index: 1, kind: input, shape index: {}]
  %s2 = inlined_call_operand.vmem [shape: f32[32,128], index: 2, kind: output, shape index: {}]
  %s3 = sld [smem:[#allocation0]]
  $region18: #{positional_encoding.1} parent=0
    _
  %s5 = ssub.s32 1, %s3
  %s6 = scalar_select 0, %s5, %s3
  // Predicated region
  $region2: #{positional_encoding.1} parent=0 // pred_check
    _
  $region3: #{positional_encoding.1} parent=0 // pred_check_branch
    %8 = sbr.rel (0) target = $region5
  $region4: #{positional_encoding.1} parent=0 // pred_region
    _
  $region5: #{positional_encoding.1} parent=0 // pred_fallthru
    _
  // Predicated region
  $region6: #{positional_encoding.1} parent=0 // pred_check
    _
  $region7: #{positional_encoding.1} parent=0 // pred_check_branch
    %10 = sbr.rel (0) target = $region9
  $region8: #{positional_encoding.1} parent=0 // pred_region
    _
  $region9: #{positional_encoding.1} parent=0 // pred_fallthru
    _
  %v11 = vld [vmem:[%s1] sm:$0xff]
  %v12 = vld [vmem:[%s1 + $0x8] sm:$0xff]
  %v13 = vld [vmem:[%s1 + $0x10] sm:$0xff]
  %v14 = vld [vmem:[%s1 + $0x18] sm:$0xff]
  %19 = vrot.lane.b32.xlu0 %v11, 32
  %v20 = vpop.permute.xlu0 %19
  %21 = vrot.lane.b32.xlu0 %v12, 32
  %v22 = vpop.permute.xlu0 %21
  %23 = vrot.lane.b32.xlu0 %v13, 32
  %v24 = vpop.permute.xlu0 %23
  %25 = vrot.lane.b32.xlu0 %v14, 32
  %v26 = vpop.permute.xlu0 %25
  %31 = vrot.lane.b32.xlu0 %v11, 64
  %v32 = vpop.permute.xlu0 %31
  %33 = vrot.lane.b32.xlu0 %v12, 64
  %v34 = vpop.permute.xlu0 %33
  %35 = vrot.lane.b32.xlu0 %v13, 64
  %v36 = vpop.permute.xlu0 %35
  %37 = vrot.lane.b32.xlu0 %v14, 64
  %v38 = vpop.permute.xlu0 %37
  %vm43 = vcmask 261120
  %v44 = vsel %vm43, %v11, %v20
  %v45 = vsel %vm43, %v12, %v22
  %v46 = vsel %vm43, %v13, %v24
  %v47 = vsel %vm43, %v14, %v26
  %vm48 = vcmask 523264
  %v49 = vsel %vm48, %v44, %v20
  %v50 = vsel %vm48, %v45, %v22
  %v51 = vsel %vm48, %v46, %v24
  %v52 = vsel %vm48, %v47, %v26
  %vm53 = vcmask 785408
  %v54 = vsel %vm53, %v49, %v32
  %v55 = vsel %vm53, %v50, %v34
  %v56 = vsel %vm53, %v51, %v36
  %v57 = vsel %vm53, %v52, %v38
  %v58 = vld [vmem:[%s0] sm:$0xff]
  %v59 = vld [vmem:[%s0 + $0x8] sm:$0xff]
  %v60 = vld [vmem:[%s0 + $0x10] sm:$0xff]
  %v61 = vld [vmem:[%s0 + $0x18] sm:$0xff]
  %v62 = vadd.f32 %v58, %v54
  %v63 = vadd.f32 %v59, %v55
  %v64 = vadd.f32 %v60, %v56
  %v65 = vadd.f32 %v61, %v57
  %66 = vst [vmem:[%s2] sm:$0xff] %v62
  %67 = vst [vmem:[%s2 + $0x8] sm:$0xff] %v63
  %68 = vst [vmem:[%s2 + $0x10] sm:$0xff] %v64
  %69 = vst [vmem:[%s2 + $0x18] sm:$0xff] %v65
  // Predicated region
  $region10: #{positional_encoding.1} parent=0 // pred_check
    _
  $region11: #{positional_encoding.1} parent=0 // pred_check_branch
    %71 = sbr.rel (0) target = $region13
  $region12: #{positional_encoding.1} parent=0 // pred_region
    _
  $region13: #{positional_encoding.1} parent=0 // pred_fallthru
    _
  // Predicated region
  $region14: #{positional_encoding.1} parent=0 // pred_check
    _
  $region15: #{positional_encoding.1} parent=0 // pred_check_branch
    %73 = sbr.rel (0) target = $region17
  $region16: #{positional_encoding.1} parent=0 // pred_region
    _
  $region17: #{positional_encoding.1} parent=0 // pred_fallthru
    _

</llo_original>
